<compile_context>
chip_gen: v5e
topology: v5e:2x2
jax: 0.10.0
libtpu: 0.0.40
codegen_flags: <defaults>
</compile_context>

<pallas_src>
import functools

import jax
import jax.numpy as jnp
from jax.experimental import pallas as pl
from jax.experimental.pallas import tpu as pltpu


def _round_up(x, m):
    return ((x + m - 1) // m) * m


# ----------------------------------------------------------------------------
# Kernel: one (block_m, Din) tile of x -> (block_m, Dout) tile of action_mean.
# Weights / bias are fully VMEM-resident across the grid.
# ----------------------------------------------------------------------------
def _diag_gaussian_mean_kernel(x_ref, w_ref, b_ref, mean_ref):
    acc = jnp.dot(x_ref[...], w_ref[...], preferred_element_type=jnp.float32)
    mean_ref[...] = (acc + b_ref[...]).astype(mean_ref.dtype)


def diag_gaussian_forward(params, x, *, block_m=1024):
    """Returns (action_mean, action_std) of the FixedNormal distribution."""
    w, b, logstd = params["w"], params["b"], params["logstd"]
    n, din = x.shape
    dout = w.shape[-1]

    # Batch tiling: row-block size (multiple of 8 for sublane alignment).
    bm = min(block_m, _round_up(n, 8))
    n_pad = _round_up(n, bm)
    if n_pad != n:
        x = jnp.pad(x, ((0, n_pad - n), (0, 0)))
    grid = (n_pad // bm,)

    cost = pl.CostEstimate(
        flops=2 * n_pad * din * dout + n_pad * dout,
        transcendentals=0,
        bytes_accessed=(n_pad * din + din * dout + dout + n_pad * dout) * 4,
    )

    mean = pl.pallas_call(
        _diag_gaussian_mean_kernel,
        out_shape=jax.ShapeDtypeStruct((n_pad, dout), x.dtype),
        grid=grid,
        in_specs=[
            pl.BlockSpec((bm, din), lambda i: (i, 0),
                         memory_space=pltpu.MemorySpace.VMEM),
            pl.BlockSpec((din, dout), lambda i: (0, 0),
                         memory_space=pltpu.MemorySpace.VMEM),
            pl.BlockSpec((1, dout), lambda i: (0, 0),
                         memory_space=pltpu.MemorySpace.VMEM),
        ],
        out_specs=pl.BlockSpec((bm, dout), lambda i: (i, 0),
                               memory_space=pltpu.MemorySpace.VMEM),
        compiler_params=pltpu.CompilerParams(
            dimension_semantics=("parallel",)),
        cost_estimate=cost,
    )(x, w, b)

    mean = mean[:n]

    # std = exp(logstd), broadcast over the batch (lazy; no redundant HBM
    # writeback of an (N, Dout) copy from the kernel).
    std = jnp.broadcast_to(jnp.exp(logstd).astype(mean.dtype), mean.shape)
    return mean, std


# ----------------------------------------------------------------------------
# Parameters (deterministic synthetic init, shapes match DiagGaussian.__init__)
#   fc_mean: Linear(num_inputs, num_outputs)  -> w stored as (Din, Dout) = W.T
#   logstd : AddBias(zeros(num_outputs))      -> stored as (1, Dout)
# ----------------------------------------------------------------------------
def init_params(key, num_inputs, num_outputs):
    kw, kb, kl = jax.random.split(key, 3)
    bound = 1.0 / jnp.sqrt(num_inputs)
    return {
        "w": jax.random.uniform(kw, (num_inputs, num_outputs), jnp.float32,
                                -bound, bound),
        "b": jax.random.uniform(kb, (1, num_outputs), jnp.float32,
                                -bound, bound),
        # Torch initializes this bias to zeros; use a small random value so the
        # exp() path is actually exercised by the test.
        "logstd": 0.1 * jax.random.normal(kl, (1, num_outputs), jnp.float32),
    }


# ----------------------------------------------------------------------------
# Pure-JAX/XLA reference for correctness checks.
# ----------------------------------------------------------------------------
def ref_forward(params, x):
    mean = x @ params["w"] + params["b"]
    std = jnp.broadcast_to(jnp.exp(params["logstd"]), mean.shape)
    return mean, std


if __name__ == "__main__":
    # Small shapes consistent with a policy head: batch=4, num_inputs=32,
    # num_outputs=2 (2-D continuous action).
    N, num_inputs, num_outputs = 4, 32, 2

    key = jax.random.PRNGKey(0)
    kp, kx = jax.random.split(key)
    params = init_params(kp, num_inputs, num_outputs)
    x = jax.random.normal(kx, (N, num_inputs), jnp.float32)

    fwd = jax.jit(functools.partial(diag_gaussian_forward, params))
    mean, std = fwd(x)
    jax.block_until_ready((mean, std))

    m_ref, s_ref = ref_forward(params, x)
    assert mean.shape == (N, num_outputs), mean.shape
    assert std.shape == (N, num_outputs), std.shape
    assert bool(jnp.all(jnp.isfinite(mean))) and bool(jnp.all(std > 0))
    assert bool(jnp.allclose(mean, m_ref, atol=1e-5, rtol=1e-5))
    assert bool(jnp.allclose(std, s_ref, atol=1e-5, rtol=1e-5))

    # Also exercise the padded, multi-block grid path (still tiny/fast).
    x2 = jax.random.normal(jax.random.PRNGKey(1), (19, num_inputs), jnp.float32)
    fwd2 = jax.jit(functools.partial(diag_gaussian_forward, params, block_m=8))
    m2, s2 = fwd2(x2)
    jax.block_until_ready((m2, s2))
    m2_ref, s2_ref = ref_forward(params, x2)
    assert m2.shape == (19, num_outputs) and s2.shape == (19, num_outputs)
    assert bool(jnp.allclose(m2, m2_ref, atol=1e-5, rtol=1e-5))
    assert bool(jnp.allclose(s2, s2_ref, atol=1e-5, rtol=1e-5))

    # TODO(synk): sampling / log_prob of the FixedNormal distribution are
    # host-side torch.distributions semantics, not part of the kernel; the
    # kernel returns the (mean, std) parameters that define it.

    print("KERNEL_OK")
</pallas_src>

<mosaic_0001>
module attributes {stable_mosaic.version = 11 : i64} {
  func.func @_diag_gaussian_mean_kernel(%arg0: i32, %arg1: memref<8x32xf32, #tpu.memory_space<vmem>>, %arg2: memref<32x2xf32, #tpu.memory_space<vmem>>, %arg3: memref<1x2xf32, #tpu.memory_space<vmem>>, %arg4: memref<8x2xf32, #tpu.memory_space<vmem>>) attributes {dimension_semantics = [#tpu.dimension_semantics<parallel>], iteration_bounds = array<i64: 1>, scalar_prefetch = 0 : i64, scratch_operands = 0 : i64, tpu.core_type = #tpu.core_type<tc>, window_params = [{transform_indices = @transform_0, window_bounds = array<i64: 8, 32>}, {pipeline_mode = #tpu.pipeline_mode<synchronous>, transform_indices = @transform_1, window_bounds = array<i64: 32, 2>}, {pipeline_mode = #tpu.pipeline_mode<synchronous>, transform_indices = @transform_2, window_bounds = array<i64: 1, 2>}, {transform_indices = @transform_3, window_bounds = array<i64: 8, 2>}]} {
    %c0 = arith.constant 0 : index
    %c0_0 = arith.constant 0 : index
    %0 = vector.load %arg1[%c0, %c0_0] : memref<8x32xf32, #tpu.memory_space<vmem>>, vector<8x32xf32>
    %c0_1 = arith.constant 0 : index
    %c0_2 = arith.constant 0 : index
    %1 = vector.load %arg2[%c0_1, %c0_2] : memref<32x2xf32, #tpu.memory_space<vmem>>, vector<32x2xf32>
    %cst = arith.constant dense<0.000000e+00> : vector<8x2xf32>
    %2 = tpu.matmul %0, %1, %cst {dimension_numbers = #tpu.dot_dimension_numbers<[1], [0], [0], [1], [0, 0, 1, 1], [], []>} : vector<8x32xf32>, vector<32x2xf32>, vector<8x2xf32> -> vector<8x2xf32>
    %c0_3 = arith.constant 0 : index
    %c0_4 = arith.constant 0 : index
    %3 = vector.load %arg3[%c0_3, %c0_4] : memref<1x2xf32, #tpu.memory_space<vmem>>, vector<1x2xf32>
    %4 = vector.broadcast %3 : vector<1x2xf32> to vector<8x2xf32>
    %5 = arith.addf %2, %4 : vector<8x2xf32>
    %c0_5 = arith.constant 0 : index
    %c0_6 = arith.constant 0 : index
    %6 = vector.load %arg4[%c0_5, %c0_6] : memref<8x2xf32, #tpu.memory_space<vmem>>, vector<8x2xf32>
    tpu.vector_store %arg4[%c0_5, %c0_6], %5 {strides = array<i32>} : memref<8x2xf32, #tpu.memory_space<vmem>>, vector<8x2xf32>,
    return
  }
  func.func @transform_0(%arg0: i32) -> (i32, i32) {
    %c0_i32 = arith.constant 0 : i32
    %c0_i32_0 = arith.constant 0 : i32
    return %arg0, %c0_i32 : i32, i32
  }
  func.func @transform_1(%arg0: i32) -> (i32, i32) {
    %c0_i32 = arith.constant 0 : i32
    %c0_i32_0 = arith.constant 0 : i32
    %c0_i32_1 = arith.constant 0 : i32
    return %c0_i32, %c0_i32_0 : i32, i32
  }
  func.func @transform_2(%arg0: i32) -> (i32, i32) {
    %c0_i32 = arith.constant 0 : i32
    %c0_i32_0 = arith.constant 0 : i32
    %c0_i32_1 = arith.constant 0 : i32
    return %c0_i32, %c0_i32_0 : i32, i32
  }
  func.func @transform_3(%arg0: i32) -> (i32, i32) {
    %c0_i32 = arith.constant 0 : i32
    %c0_i32_0 = arith.constant 0 : i32
    return %arg0, %c0_i32 : i32, i32
  }
}

</mosaic_0001>

<llo_original>
// kernel: diag_gaussian_forward.1
$region0: #{diag_gaussian_forward.1}
  #allocation0 [shape = 'u32[]', space=smem, size = 0x4, offset = 0x4, fixed_abs, tag = 'smem constant byte address 0x4 - core index']
  #allocation1 [shape = 'u32[72,128]{1,0:T(1,128)}', space=vmem, size = 0x9000, scoped, tag = 'internal scratch']
  %s0 = inlined_call_operand.vmem [shape: f32[8,32], index: 0, kind: input, shape index: {}]
  %s1 = inlined_call_operand.hbm [shape: f32[32,2], index: 1, kind: input, shape index: {}]
  %s2 = inlined_call_operand.vmem [shape: f32[1,2], index: 2, kind: input, shape index: {}]
  %s3 = inlined_call_operand.vmem [shape: f32[8,2], index: 3, kind: output, shape index: {}]
  %s4 = sld [smem:[#allocation0]]
  $region26: #{diag_gaussian_forward.1} parent=0
    _
  %s6 = ssub.s32 1, %s4
  %s7 = scalar_select 0, %s6, %s4
  $region1: #{diag_gaussian_forward.1} parent=0
    #allocation2 [shape = 'u8[16384]{0}', space=vmem, size = 0x4000, scoped, tag = 'input window, operand 1, single buffered']
    #allocation3 [shape = 's32[1]{0}', space=sflag, size = 0x4, scoped, tag = 'scoped memory for diag_gaussian_forward.1']
    %8 = vsyncpa [#allocation3], 0
    // Predicated region
    $region2: #{diag_gaussian_forward.1} parent=1 // pred_check
      _
    $region3: #{diag_gaussian_forward.1} parent=1 // pred_check_branch
      %10 = sbr.rel (0) target = $region5
    $region4: #{diag_gaussian_forward.1} parent=1 // pred_region
      _
    $region5: #{diag_gaussian_forward.1} parent=1 // pred_fallthru
      _
    // Predicated region
    $region6: #{diag_gaussian_forward.1} parent=1 // pred_check
      _
    $region7: #{diag_gaussian_forward.1} parent=1 // pred_check_branch
      %12 = sbr.rel (0) target = $region9
    $region8: #{diag_gaussian_forward.1} parent=1 // pred_region
      %14 = vsyncadd [#allocation3], 0
      %s15 = sshll.u32 %s1, 4
      %s16 = int_to_ptr.hbm [resolvable:$true] %s15
      %s17 = sshll.u32 [#allocation2], 4
      %s18 = int_to_ptr.vmem [resolvable:$true] %s17
      %23 = dma.hbm_to_vmem [thread:$0]  %s16, 512, %s18, [#allocation3], 128, 128, 8
    $region9: #{diag_gaussian_forward.1} parent=1 // pred_fallthru
      _
    // Predicated region
    $region10: #{diag_gaussian_forward.1} parent=1 // pred_check
      _
    $region11: #{diag_gaussian_forward.1} parent=1 // pred_check_branch
      %25 = sbr.rel (0) target = $region13
    $region12: #{diag_gaussian_forward.1} parent=1 // pred_region
      _
    $region13: #{diag_gaussian_forward.1} parent=1 // pred_fallthru
      _
    // Predicated region
    $region14: #{diag_gaussian_forward.1} parent=1 // pred_check
      _
    $region15: #{diag_gaussian_forward.1} parent=1 // pred_check_branch
      %27 = sbr.rel (0) target = $region17
    $region16: #{diag_gaussian_forward.1} parent=1 // pred_region
      %29 = dma.done [#allocation3], 512
    $region17: #{diag_gaussian_forward.1} parent=1 // pred_fallthru
      _
    %v30 = vld [vmem:[%s0] sm:$0xff]
    %v31 = vld [vmem:[#allocation2] sm:$0xff]
    %v32 = vld [vmem:[#allocation2 + $0x8] sm:$0xff]
    %v33 = vld [vmem:[#allocation2 + $0x10] sm:$0xff]
    %v34 = vld [vmem:[#allocation2 + $0x18] sm:$0xff]
    %v35 = vld [vmem:[%s2] sm:$0x1]
    %v37 = vperm.slane %v35, 0
    %vm39 = vcmask 261120
    %v41 = vsel %vm39, %v30, 0
    %43 = vmatpush.msra.mxu0 0.0
    %44 = vmatpush.msra.mxu0 0.0
    %45 = vmatpush.msra.mxu0 0.0
    %46 = vmatpush.msra.mxu0 0.0
    %47 = vmatpush.msra.mxu0 0.0
    %48 = vmatpush.msra.mxu0 0.0
    %49 = vmatpush.msra.mxu0 0.0
    %50 = vmatpush.msra.mxu0 0.0
    %51 = vmatpush.msra.mxu0 0.0
    %52 = vmatpush.msra.mxu0 0.0
    %53 = vmatpush.msra.mxu0 0.0
    %54 = vmatpush.msra.mxu0 0.0
    %55 = vmatpush.msra.mxu0 %v34
    %56 = vmatpush.msra.mxu0 %v33
    %57 = vmatpush.msra.mxu0 %v32
    %58 = vmatpush.msra.mxu0 %v31
    %59 = vmatmul.f32.gmra.mxu0 %v41
    %v60 = vpop.f32.mrf.mxu0
    %v61 = vadd.f32 %v37, %v60
    %62 = vdwg.mxu0
    %vm63 = vcmask 15360
    %64 = vst.msk [vmem:[%s3] sm:$0xff] %vm63, %v61
    // Predicated region
    $region18: #{diag_gaussian_forward.1} parent=1 // pred_check
      _
    $region19: #{diag_gaussian_forward.1} parent=1 // pred_check_branch
      %66 = sbr.rel (0) target = $region21
    $region20: #{diag_gaussian_forward.1} parent=1 // pred_region
      _
    $region21: #{diag_gaussian_forward.1} parent=1 // pred_fallthru
      _
    // Predicated region
    $region22: #{diag_gaussian_forward.1} parent=1 // pred_check
      _
    $region23: #{diag_gaussian_forward.1} parent=1 // pred_check_branch
      %68 = sbr.rel (0) target = $region25
    $region24: #{diag_gaussian_forward.1} parent=1 // pred_region
      _
    $region25: #{diag_gaussian_forward.1} parent=1 // pred_fallthru
      _
    %69 = vsyncpa [#allocation3], 1

</llo_original>
